<compile_context>
chip_gen: v5e
topology: v5e:2x2
jax: 0.10.0
libtpu: 0.0.40
codegen_flags: <defaults>
</compile_context>

<pallas_src>
import functools

import jax
import jax.numpy as jnp
from jax import lax
from jax.experimental import pallas as pl
from jax.experimental.pallas import tpu as pltpu


def _lstm_chunk_kernel(xe_ref, wih_t_ref, whh_t_ref, b_ref, wfc_ref, bfc_ref,
                       out_ref, h_sc, c_sc, gx_sc,
                       *, T, C, Bp, H, unroll, mask_tail):
    """One grid step = one chunk of C timesteps.

    xe_ref    : (C*Bp, E)  bf16  time-major embedded inputs for this chunk
    wih_t_ref : (E, 4H)    bf16  pre-transposed W_ih
    whh_t_ref : (H, 4H)    bf16  pre-transposed W_hh
    b_ref     : (1, 4H)    f32   b_ih + b_hh
    wfc_ref   : (1, H)     f32   FC weight row
    bfc_ref   : (1, 1)     f32   FC bias
    out_ref   : (Bp, 1)    f32   written at the last grid step only
    h_sc,c_sc : (Bp, H)    f32   recurrent state; persists across grid steps
    gx_sc     : (C*Bp,4H)  f32   per-chunk hoisted input projection
    """
    t_chunk = pl.program_id(0)

    @pl.when(t_chunk == 0)
    def _():
        h_sc[...] = jnp.zeros_like(h_sc)
        c_sc[...] = jnp.zeros_like(c_sc)

    # Phase 1 (per chunk): all C input projections in ONE bf16 MXU matmul
    # with f32 accumulation; no serial dependence, and the next chunk's xe
    # DMA is overlapped by BlockSpec double-buffering.
    gx_sc[...] = (jnp.dot(xe_ref[...], wih_t_ref[...],
                          preferred_element_type=jnp.float32)
                  + b_ref[...])

    whh_t = whh_t_ref[...]                       # bf16, loop-invariant

    # Phase 2: serial recurrence.  Per step only a (Bp,H)x(H,4H) bf16 matmul,
    # one full-block sigmoid, and two tanh sit on the h-dependency chain.
    # Gate order matches PyTorch nn.LSTM: [i, f, g, o].
    def step(s, carry):
        h, c = carry
        row = pl.multiple_of(s * Bp, 8)          # Bp is a multiple of 8
        gates = (gx_sc[pl.ds(row, Bp), :]
                 + jnp.dot(h.astype(jnp.bfloat16), whh_t,
                           preferred_element_type=jnp.float32))
        sig = jax.nn.sigmoid(gates)              # one full (Bp,4H) EUP push
        i_g = sig[:, 0:H]
        f_g = sig[:, H:2 * H]
        o_g = sig[:, 3 * H:4 * H]
        g_g = jnp.tanh(gates[:, 2 * H:3 * H])
        c_new = f_g * c + i_g * g_g
        h_new = o_g * jnp.tanh(c_new)
        if mask_tail:
            # Padded timesteps of the (ragged) last chunk leave state unchanged.
            keep = ((t_chunk * C + s) < T).astype(jnp.float32)
            h_new = keep * h_new + (1.0 - keep) * h
            c_new = keep * c_new + (1.0 - keep) * c
        return h_new, c_new

    h_fin, c_fin = lax.fori_loop(0, C, step, (h_sc[...], c_sc[...]),
                                 unroll=unroll)
    h_sc[...] = h_fin
    c_sc[...] = c_fin

    # Phase 3 (last chunk only): Linear(H,1) + sigmoid as a VPU/XLU lane
    # reduction (avoids a width-1 MXU matmul); single (Bp,1) store.
    @pl.when(t_chunk == pl.num_programs(0) - 1)
    def _():
        logits = (jnp.sum(h_fin * wfc_ref[...], axis=-1, keepdims=True)
                  + bfc_ref[...])
        out_ref[...] = jax.nn.sigmoid(logits)


def vulncrypt_forward(x_tokens, params, *, time_chunk=None,
                      vmem_budget_bytes=16 << 20):
    """x_tokens: (B, T) int32 token ids.  Returns (B, 1) float32 in (0,1)."""
    emb_table = params["embedding"]          # (V, E), row 0 zeroed (padding_idx=0)
    w_ih = params["w_ih"]                    # (4H, E)
    w_hh = params["w_hh"]                    # (4H, H)
    b_all = params["b_ih"] + params["b_hh"]  # (4H,)
    w_fc = params["w_fc"]                    # (1, H)
    b_fc = params["b_fc"]                    # (1,)

    B, T = x_tokens.shape
    E = emb_table.shape[1]
    H = w_hh.shape[1]

    # Pad batch to the 8-sublane multiple (production: pad toward 128/256).
    Bp = ((B + 7) // 8) * 8

    # Pick a time-chunk C so double-buffered xe chunks + gx scratch fit the
    # per-generation VMEM budget (re-derived for v7x's 64 MiB VMEM).
    if time_chunk is None:
        per_step_bytes = Bp * (2 * E * 2 + 4 * H * 4)  # 2x bf16 xe bufs + f32 gx
        time_chunk = max(1, min(T, vmem_budget_bytes // max(per_step_bytes, 1)))
    C = int(time_chunk)
    n_chunks = -(-T // C)
    Tp = n_chunks * C

    # TODO(synk): move the embedding gather in-kernel (scalar-prefetched token
    # ids + row gather from an HBM-resident table) to avoid materializing the
    # (Tp*Bp, E) activation in HBM; kept wrapper-side for simplicity.
    embeds = jnp.take(emb_table, x_tokens, axis=0)                 # (B, T, E)
    embeds = jnp.pad(embeds, ((0, Bp - B), (0, Tp - T), (0, 0)))   # (Bp, Tp, E)
    xe = (jnp.transpose(embeds, (1, 0, 2))
          .reshape(Tp * Bp, E).astype(jnp.bfloat16))               # (Tp*Bp, E)

    # Pre-transpose weights once; bf16 MXU operands, f32 accumulation in-kernel.
    wih_t = w_ih.T.astype(jnp.bfloat16)                            # (E, 4H)
    whh_t = w_hh.T.astype(jnp.bfloat16)                            # (H, 4H)
    b2 = b_all.reshape(1, 4 * H).astype(jnp.float32)
    wfc2 = w_fc.astype(jnp.float32)
    bfc2 = b_fc.reshape(1, 1).astype(jnp.float32)

    # Explicit VMEM budget (auditable against each generation's limit).
    est_bytes = (2 * C * Bp * E * 2            # xe double buffer (bf16)
                 + C * Bp * 4 * H * 4          # gx scratch (f32)
                 + 2 * (E + H) * 4 * H * 2     # weights, double-buffered (bf16)
                 + 2 * Bp * H * 4              # h, c state
                 + (5 * H + 2) * 4             # biases + fc
                 + Bp * 4)                     # out
    vmem_limit = int(min(max(4 * est_bytes, 16 << 20), 48 << 20))

    kernel = functools.partial(
        _lstm_chunk_kernel, T=T, C=C, Bp=Bp, H=H,
        unroll=min(C, 8), mask_tail=(Tp != T))

    out_p = pl.pallas_call(
        kernel,
        out_shape=jax.ShapeDtypeStruct((Bp, 1), jnp.float32),
        grid=(n_chunks,),
        in_specs=[
            pl.BlockSpec((C * Bp, E), lambda t: (t, 0)),   # xe: one time chunk
            pl.BlockSpec((E, 4 * H), lambda t: (0, 0)),    # W_ih^T (resident)
            pl.BlockSpec((H, 4 * H), lambda t: (0, 0)),    # W_hh^T (resident)
            pl.BlockSpec((1, 4 * H), lambda t: (0, 0)),    # LSTM bias
            pl.BlockSpec((1, H), lambda t: (0, 0)),        # FC weight
            pl.BlockSpec((1, 1), lambda t: (0, 0)),        # FC bias
        ],
        out_specs=pl.BlockSpec((Bp, 1), lambda t: (0, 0)),
        scratch_shapes=[
            pltpu.VMEM((Bp, H), jnp.float32),              # h state
            pltpu.VMEM((Bp, H), jnp.float32),              # c state
            pltpu.VMEM((C * Bp, 4 * H), jnp.float32),      # per-chunk input proj
        ],
        compiler_params=pltpu.CompilerParams(
            dimension_semantics=("arbitrary",),            # serial over time
            vmem_limit_bytes=vmem_limit,
        ),
    )(xe, wih_t, whh_t, b2, wfc2, bfc2)
    return out_p[:B]


def reference_forward(x_tokens, params):
    """Pure-JAX f32 reference (PyTorch LSTM semantics) for correctness check."""
    w_ih, w_hh = params["w_ih"], params["w_hh"]
    b = params["b_ih"] + params["b_hh"]
    H = w_hh.shape[1]
    B = x_tokens.shape[0]
    emb = jnp.take(params["embedding"], x_tokens, axis=0)          # (B, T, E)

    def step(carry, x_t):
        h, c = carry
        gates = x_t @ w_ih.T + h @ w_hh.T + b
        i = jax.nn.sigmoid(gates[:, 0:H])
        f = jax.nn.sigmoid(gates[:, H:2 * H])
        g = jnp.tanh(gates[:, 2 * H:3 * H])
        o = jax.nn.sigmoid(gates[:, 3 * H:4 * H])
        c = f * c + i * g
        h = o * jnp.tanh(c)
        return (h, c), None

    h0 = jnp.zeros((B, H), jnp.float32)
    c0 = jnp.zeros((B, H), jnp.float32)
    (h_fin, _), _ = lax.scan(step, (h0, c0), jnp.transpose(emb, (1, 0, 2)))
    logits = h_fin @ params["w_fc"].T + params["b_fc"]
    return jax.nn.sigmoid(logits)


def init_params(key, vocab_size, embedding_dim, hidden_dim):
    k = jax.random.split(key, 7)
    s = 0.1
    emb = s * jax.random.normal(k[0], (vocab_size, embedding_dim), jnp.float32)
    emb = emb.at[0].set(0.0)  # padding_idx=0
    return {
        "embedding": emb,
        "w_ih": s * jax.random.normal(k[1], (4 * hidden_dim, embedding_dim), jnp.float32),
        "w_hh": s * jax.random.normal(k[2], (4 * hidden_dim, hidden_dim), jnp.float32),
        "b_ih": s * jax.random.normal(k[3], (4 * hidden_dim,), jnp.float32),
        "b_hh": s * jax.random.normal(k[4], (4 * hidden_dim,), jnp.float32),
        "w_fc": s * jax.random.normal(k[5], (1, hidden_dim), jnp.float32),
        "b_fc": s * jax.random.normal(k[6], (1,), jnp.float32),
    }


if __name__ == "__main__":
    vocab_size, embedding_dim, hidden_dim = 50, 16, 32
    batch, seq = 2, 8

    key = jax.random.PRNGKey(0)
    pkey, xkey = jax.random.split(key)
    params = init_params(pkey, vocab_size, embedding_dim, hidden_dim)
    x = jax.random.randint(xkey, (batch, seq), 0, vocab_size, dtype=jnp.int32)

    ref = jax.block_until_ready(reference_forward(x, params))

    # Single-chunk path (C = T).
    out = jax.block_until_ready(vulncrypt_forward(x, params))
    assert out.shape == (batch, 1)
    assert bool(jnp.all((out > 0.0) & (out < 1.0)))
    assert bool(jnp.allclose(out, ref, atol=2e-3)), (out, ref)

    # Multi-chunk path with a ragged last chunk (exercises the grid pipeline
    # and the tail mask).
    out2 = jax.block_until_ready(vulncrypt_forward(x, params, time_chunk=3))
    assert bool(jnp.allclose(out2, ref, atol=2e-3)), (out2, ref)

    print("KERNEL_OK")
</pallas_src>

<mosaic_0001>
module attributes {stable_mosaic.version = 11 : i64} {
  func.func @_lstm_chunk_kernel(%arg0: i32, %arg1: memref<64x16xbf16, #tpu.memory_space<vmem>>, %arg2: memref<16x128xbf16, #tpu.memory_space<vmem>>, %arg3: memref<32x128xbf16, #tpu.memory_space<vmem>>, %arg4: memref<1x128xf32, #tpu.memory_space<vmem>>, %arg5: memref<1x32xf32, #tpu.memory_space<vmem>>, %arg6: memref<1x1xf32, #tpu.memory_space<vmem>>, %arg7: memref<8x1xf32, #tpu.memory_space<vmem>>, %arg8: memref<8x32xf32, #tpu.memory_space<vmem>>, %arg9: memref<8x32xf32, #tpu.memory_space<vmem>>, %arg10: memref<64x128xf32, #tpu.memory_space<vmem>>) attributes {dimension_semantics = [#tpu.dimension_semantics<arbitrary>], iteration_bounds = array<i64: 1>, scalar_prefetch = 0 : i64, scratch_operands = 3 : i64, tpu.core_type = #tpu.core_type<tc>, window_params = [{transform_indices = @transform_0, window_bounds = array<i64: 64, 16>}, {pipeline_mode = #tpu.pipeline_mode<synchronous>, transform_indices = @transform_1, window_bounds = array<i64: 16, 128>}, {pipeline_mode = #tpu.pipeline_mode<synchronous>, transform_indices = @transform_2, window_bounds = array<i64: 32, 128>}, {pipeline_mode = #tpu.pipeline_mode<synchronous>, transform_indices = @transform_3, window_bounds = array<i64: 1, 128>}, {pipeline_mode = #tpu.pipeline_mode<synchronous>, transform_indices = @transform_4, window_bounds = array<i64: 1, 32>}, {pipeline_mode = #tpu.pipeline_mode<synchronous>, transform_indices = @transform_5, window_bounds = array<i64: 1, 1>}, {pipeline_mode = #tpu.pipeline_mode<synchronous>, transform_indices = @transform_6, window_bounds = array<i64: 8, 1>}]} {
    %c0_i32 = arith.constant 0 : i32
    %0 = arith.cmpi eq, %arg0, %c0_i32 : i32
    %1 = arith.extui %0 : i1 to i32
    %c0_i32_0 = arith.constant 0 : i32
    %2 = arith.cmpi ne, %1, %c0_i32_0 : i32
    scf.if %2 {
      %cst_53 = arith.constant 0.000000e+00 : f32
      %194 = vector.broadcast %cst_53 : f32 to vector<8x32xf32>
      %c0_54 = arith.constant 0 : index
      %c0_55 = arith.constant 0 : index
      %195 = vector.load %arg8[%c0_54, %c0_55] : memref<8x32xf32, #tpu.memory_space<vmem>>, vector<8x32xf32>
      tpu.vector_store %arg8[%c0_54, %c0_55], %194 {strides = array<i32>} : memref<8x32xf32, #tpu.memory_space<vmem>>, vector<8x32xf32>,
      %cst_56 = arith.constant 0.000000e+00 : f32
      %196 = vector.broadcast %cst_56 : f32 to vector<8x32xf32>
      %c0_57 = arith.constant 0 : index
      %c0_58 = arith.constant 0 : index
      %197 = vector.load %arg9[%c0_57, %c0_58] : memref<8x32xf32, #tpu.memory_space<vmem>>, vector<8x32xf32>
      tpu.vector_store %arg9[%c0_57, %c0_58], %196 {strides = array<i32>} : memref<8x32xf32, #tpu.memory_space<vmem>>, vector<8x32xf32>,
    } else {
    }
    %c0 = arith.constant 0 : index
    %c0_1 = arith.constant 0 : index
    %3 = vector.load %arg1[%c0, %c0_1] : memref<64x16xbf16, #tpu.memory_space<vmem>>, vector<64x16xbf16>
    %c0_2 = arith.constant 0 : index
    %c0_3 = arith.constant 0 : index
    %4 = vector.load %arg2[%c0_2, %c0_3] : memref<16x128xbf16, #tpu.memory_space<vmem>>, vector<16x128xbf16>
    %cst = arith.constant dense<0.000000e+00> : vector<64x128xf32>
    %5 = tpu.matmul %3, %4, %cst {dimension_numbers = #tpu.dot_dimension_numbers<[1], [0], [0], [1], [0, 0, 1, 1], [], []>} : vector<64x16xbf16>, vector<16x128xbf16>, vector<64x128xf32> -> vector<64x128xf32>
    %c0_4 = arith.constant 0 : index
    %c0_5 = arith.constant 0 : index
    %6 = vector.load %arg4[%c0_4, %c0_5] : memref<1x128xf32, #tpu.memory_space<vmem>>, vector<1x128xf32>
    %7 = vector.broadcast %6 : vector<1x128xf32> to vector<64x128xf32>
    %8 = arith.addf %5, %7 : vector<64x128xf32>
    %c0_6 = arith.constant 0 : index
    %c0_7 = arith.constant 0 : index
    %9 = vector.load %arg10[%c0_6, %c0_7] : memref<64x128xf32, #tpu.memory_space<vmem>>, vector<64x128xf32>
    tpu.vector_store %arg10[%c0_6, %c0_7], %8 {strides = array<i32>} : memref<64x128xf32, #tpu.memory_space<vmem>>, vector<64x128xf32>,
    %c0_8 = arith.constant 0 : index
    %c0_9 = arith.constant 0 : index
    %10 = vector.load %arg3[%c0_8, %c0_9] : memref<32x128xbf16, #tpu.memory_space<vmem>>, vector<32x128xbf16>
    %c0_10 = arith.constant 0 : index
    %c0_11 = arith.constant 0 : index
    %11 = vector.load %arg8[%c0_10, %c0_11] : memref<8x32xf32, #tpu.memory_space<vmem>>, vector<8x32xf32>
    %c0_12 = arith.constant 0 : index
    %c0_13 = arith.constant 0 : index
    %12 = vector.load %arg9[%c0_12, %c0_13] : memref<8x32xf32, #tpu.memory_space<vmem>>, vector<8x32xf32>
    %c0_i32_14 = arith.constant 0 : i32
    %c8_i32 = arith.constant 8 : i32
    %13 = arith.muli %c0_i32_14, %c8_i32 : i32
    %14 = tpu.assume_multiple %13, 8 : i32
    %15 = arith.index_cast %14 : i32 to index
    %c0_15 = arith.constant 0 : index
    %16 = vector.load %arg10[%15, %c0_15] : memref<64x128xf32, #tpu.memory_space<vmem>>, vector<8x128xf32>
    %17 = arith.truncf %11 : vector<8x32xf32> to vector<8x32xbf16>
    %cst_16 = arith.constant dense<0.000000e+00> : vector<8x128xf32>
    %18 = tpu.matmul %17, %10, %cst_16 {dimension_numbers = #tpu.dot_dimension_numbers<[1], [0], [0], [1], [0, 0, 1, 1], [], []>} : vector<8x32xbf16>, vector<32x128xbf16>, vector<8x128xf32> -> vector<8x128xf32>
    %19 = arith.addf %16, %18 : vector<8x128xf32>
    %20 = arith.negf %19 : vector<8x128xf32>
    %21 = math.exp %20 : vector<8x128xf32>
    %cst_17 = arith.constant 1.000000e+00 : f32
    %22 = vector.broadcast %cst_17 : f32 to vector<8x128xf32>
    %23 = arith.addf %22, %21 : vector<8x128xf32>
    %24 = arith.divf %22, %23 : vector<8x128xf32>
    %25 = vector.extract_strided_slice %24 {offsets = [0, 0], sizes = [8, 32], strides = [1, 1]} : vector<8x128xf32> to vector<8x32xf32>
    %26 = vector.extract_strided_slice %24 {offsets = [0, 32], sizes = [8, 32], strides = [1, 1]} : vector<8x128xf32> to vector<8x32xf32>
    %27 = vector.extract_strided_slice %24 {offsets = [0, 96], sizes = [8, 32], strides = [1, 1]} : vector<8x128xf32> to vector<8x32xf32>
    %28 = vector.extract_strided_slice %19 {offsets = [0, 64], sizes = [8, 32], strides = [1, 1]} : vector<8x128xf32> to vector<8x32xf32>
    %29 = math.tanh %28 : vector<8x32xf32>
    %30 = arith.mulf %26, %12 : vector<8x32xf32>
    %31 = arith.mulf %25, %29 : vector<8x32xf32>
    %32 = arith.addf %30, %31 : vector<8x32xf32>
    %33 = math.tanh %32 : vector<8x32xf32>
    %34 = arith.mulf %27, %33 : vector<8x32xf32>
    %c1_i32 = arith.constant 1 : i32
    %c8_i32_18 = arith.constant 8 : i32
    %35 = arith.muli %c1_i32, %c8_i32_18 : i32
    %36 = tpu.assume_multiple %35, 8 : i32
    %37 = arith.index_cast %36 : i32 to index
    %c0_19 = arith.constant 0 : index
    %38 = vector.load %arg10[%37, %c0_19] : memref<64x128xf32, #tpu.memory_space<vmem>>, vector<8x128xf32>
    %39 = arith.truncf %34 : vector<8x32xf32> to vector<8x32xbf16>
    %cst_20 = arith.constant dense<0.000000e+00> : vector<8x128xf32>
    %40 = tpu.matmul %39, %10, %cst_20 {dimension_numbers = #tpu.dot_dimension_numbers<[1], [0], [0], [1], [0, 0, 1, 1], [], []>} : vector<8x32xbf16>, vector<32x128xbf16>, vector<8x128xf32> -> vector<8x128xf32>
    %41 = arith.addf %38, %40 : vector<8x128xf32>
    %42 = arith.negf %41 : vector<8x128xf32>
    %43 = math.exp %42 : vector<8x128xf32>
    %cst_21 = arith.constant 1.000000e+00 : f32
    %44 = vector.broadcast %cst_21 : f32 to vector<8x128xf32>
    %45 = arith.addf %44, %43 : vector<8x128xf32>
    %46 = arith.divf %44, %45 : vector<8x128xf32>
    %47 = vector.extract_strided_slice %46 {offsets = [0, 0], sizes = [8, 32], strides = [1, 1]} : vector<8x128xf32> to vector<8x32xf32>
    %48 = vector.extract_strided_slice %46 {offsets = [0, 32], sizes = [8, 32], strides = [1, 1]} : vector<8x128xf32> to vector<8x32xf32>
    %49 = vector.extract_strided_slice %46 {offsets = [0, 96], sizes = [8, 32], strides = [1, 1]} : vector<8x128xf32> to vector<8x32xf32>
    %50 = vector.extract_strided_slice %41 {offsets = [0, 64], sizes = [8, 32], strides = [1, 1]} : vector<8x128xf32> to vector<8x32xf32>
    %51 = math.tanh %50 : vector<8x32xf32>
    %52 = arith.mulf %48, %32 : vector<8x32xf32>
    %53 = arith.mulf %47, %51 : vector<8x32xf32>
    %54 = arith.addf %52, %53 : vector<8x32xf32>
    %55 = math.tanh %54 : vector<8x32xf32>
    %56 = arith.mulf %49, %55 : vector<8x32xf32>
    %c2_i32 = arith.constant 2 : i32
    %c8_i32_22 = arith.constant 8 : i32
    %57 = arith.muli %c2_i32, %c8_i32_22 : i32
    %58 = tpu.assume_multiple %57, 8 : i32
    %59 = arith.index_cast %58 : i32 to index
    %c0_23 = arith.constant 0 : index
    %60 = vector.load %arg10[%59, %c0_23] : memref<64x128xf32, #tpu.memory_space<vmem>>, vector<8x128xf32>
    %61 = arith.truncf %56 : vector<8x32xf32> to vector<8x32xbf16>
    %cst_24 = arith.constant dense<0.000000e+00> : vector<8x128xf32>
    %62 = tpu.matmul %61, %10, %cst_24 {dimension_numbers = #tpu.dot_dimension_numbers<[1], [0], [0], [1], [0, 0, 1, 1], [], []>} : vector<8x32xbf16>, vector<32x128xbf16>, vector<8x128xf32> -> vector<8x128xf32>
    %63 = arith.addf %60, %62 : vector<8x128xf32>
    %64 = arith.negf %63 : vector<8x128xf32>
    %65 = math.exp %64 : vector<8x128xf32>
    %cst_25 = arith.constant 1.000000e+00 : f32
    %66 = vector.broadcast %cst_25 : f32 to vector<8x128xf32>
    %67 = arith.addf %66, %65 : vector<8x128xf32>
    %68 = arith.divf %66, %67 : vector<8x128xf32>
    %69 = vector.extract_strided_slice %68 {offsets = [0, 0], sizes = [8, 32], strides = [1, 1]} : vector<8x128xf32> to vector<8x32xf32>
    %70 = vector.extract_strided_slice %68 {offsets = [0, 32], sizes = [8, 32], strides = [1, 1]} : vector<8x128xf32> to vector<8x32xf32>
    %71 = vector.extract_strided_slice %68 {offsets = [0, 96], sizes = [8, 32], strides = [1, 1]} : vector<8x128xf32> to vector<8x32xf32>
    %72 = vector.extract_strided_slice %63 {offsets = [0, 64], sizes = [8, 32], strides = [1, 1]} : vector<8x128xf32> to vector<8x32xf32>
    %73 = math.tanh %72 : vector<8x32xf32>
    %74 = arith.mulf %70, %54 : vector<8x32xf32>
    %75 = arith.mulf %69, %73 : vector<8x32xf32>
    %76 = arith.addf %74, %75 : vector<8x32xf32>
    %77 = math.tanh %76 : vector<8x32xf32>
    %78 = arith.mulf %71, %77 : vector<8x32xf32>
    %c3_i32 = arith.constant 3 : i32
    %c8_i32_26 = arith.constant 8 : i32
    %79 = arith.muli %c3_i32, %c8_i32_26 : i32
    %80 = tpu.assume_multiple %79, 8 : i32
    %81 = arith.index_cast %80 : i32 to index
    %c0_27 = arith.constant 0 : index
    %82 = vector.load %arg10[%81, %c0_27] : memref<64x128xf32, #tpu.memory_space<vmem>>, vector<8x128xf32>
    %83 = arith.truncf %78 : vector<8x32xf32> to vector<8x32xbf16>
    %cst_28 = arith.constant dense<0.000000e+00> : vector<8x128xf32>
    %84 = tpu.matmul %83, %10, %cst_28 {dimension_numbers = #tpu.dot_dimension_numbers<[1], [0], [0], [1], [0, 0, 1, 1], [], []>} : vector<8x32xbf16>, vector<32x128xbf16>, vector<8x128xf32> -> vector<8x128xf32>
    %85 = arith.addf %82, %84 : vector<8x128xf32>
    %86 = arith.negf %85 : vector<8x128xf32>
    %87 = math.exp %86 : vector<8x128xf32>
    %cst_29 = arith.constant 1.000000e+00 : f32
    %88 = vector.broadcast %cst_29 : f32 to vector<8x128xf32>
    %89 = arith.addf %88, %87 : vector<8x128xf32>
    %90 = arith.divf %88, %89 : vector<8x128xf32>
    %91 = vector.extract_strided_slice %90 {offsets = [0, 0], sizes = [8, 32], strides = [1, 1]} : vector<8x128xf32> to vector<8x32xf32>
    %92 = vector.extract_strided_slice %90 {offsets = [0, 32], sizes = [8, 32], strides = [1, 1]} : vector<8x128xf32> to vector<8x32xf32>
    %93 = vector.extract_strided_slice %90 {offsets = [0, 96], sizes = [8, 32], strides = [1, 1]} : vector<8x128xf32> to vector<8x32xf32>
    %94 = vector.extract_strided_slice %85 {offsets = [0, 64], sizes = [8, 32], strides = [1, 1]} : vector<8x128xf32> to vector<8x32xf32>
    %95 = math.tanh %94 : vector<8x32xf32>
    %96 = arith.mulf %92, %76 : vector<8x32xf32>
    %97 = arith.mulf %91, %95 : vector<8x32xf32>
    %98 = arith.addf %96, %97 : vector<8x32xf32>
    %99 = math.tanh %98 : vector<8x32xf32>
    %100 = arith.mulf %93, %99 : vector<8x32xf32>
    %c4_i32 = arith.constant 4 : i32
    %c8_i32_30 = arith.constant 8 : i32
    %101 = arith.muli %c4_i32, %c8_i32_30 : i32
    %102 = tpu.assume_multiple %101, 8 : i32
    %103 = arith.index_cast %102 : i32 to index
    %c0_31 = arith.constant 0 : index
    %104 = vector.load %arg10[%103, %c0_31] : memref<64x128xf32, #tpu.memory_space<vmem>>, vector<8x128xf32>
    %105 = arith.truncf %100 : vector<8x32xf32> to vector<8x32xbf16>
    %cst_32 = arith.constant dense<0.000000e+00> : vector<8x128xf32>
    %106 = tpu.matmul %105, %10, %cst_32 {dimension_numbers = #tpu.dot_dimension_numbers<[1], [0], [0], [1], [0, 0, 1, 1], [], []>} : vector<8x32xbf16>, vector<32x128xbf16>, vector<8x128xf32> -> vector<8x128xf32>
    %107 = arith.addf %104, %106 : vector<8x128xf32>
    %108 = arith.negf %107 : vector<8x128xf32>
    %109 = math.exp %108 : vector<8x128xf32>
    %cst_33 = arith.constant 1.000000e+00 : f32
    %110 = vector.broadcast %cst_33 : f32 to vector<8x128xf32>
    %111 = arith.addf %110, %109 : vector<8x128xf32>
    %112 = arith.divf %110, %111 : vector<8x128xf32>
    %113 = vector.extract_strided_slice %112 {offsets = [0, 0], sizes = [8, 32], strides = [1, 1]} : vector<8x128xf32> to vector<8x32xf32>
    %114 = vector.extract_strided_slice %112 {offsets = [0, 32], sizes = [8, 32], strides = [1, 1]} : vector<8x128xf32> to vector<8x32xf32>
    %115 = vector.extract_strided_slice %112 {offsets = [0, 96], sizes = [8, 32], strides = [1, 1]} : vector<8x128xf32> to vector<8x32xf32>
    %116 = vector.extract_strided_slice %107 {offsets = [0, 64], sizes = [8, 32], strides = [1, 1]} : vector<8x128xf32> to vector<8x32xf32>
    %117 = math.tanh %116 : vector<8x32xf32>
    %118 = arith.mulf %114, %98 : vector<8x32xf32>
    %119 = arith.mulf %113, %117 : vector<8x32xf32>
    %120 = arith.addf %118, %119 : vector<8x32xf32>
    %121 = math.tanh %120 : vector<8x32xf32>
    %122 = arith.mulf %115, %121 : vector<8x32xf32>
    %c5_i32 = arith.constant 5 : i32
    %c8_i32_34 = arith.constant 8 : i32
    %123 = arith.muli %c5_i32, %c8_i32_34 : i32
    %124 = tpu.assume_multiple %123, 8 : i32
    %125 = arith.index_cast %124 : i32 to index
    %c0_35 = arith.constant 0 : index
    %126 = vector.load %arg10[%125, %c0_35] : memref<64x128xf32, #tpu.memory_space<vmem>>, vector<8x128xf32>
    %127 = arith.truncf %122 : vector<8x32xf32> to vector<8x32xbf16>
    %cst_36 = arith.constant dense<0.000000e+00> : vector<8x128xf32>
    %128 = tpu.matmul %127, %10, %cst_36 {dimension_numbers = #tpu.dot_dimension_numbers<[1], [0], [0], [1], [0, 0, 1, 1], [], []>} : vector<8x32xbf16>, vector<32x128xbf16>, vector<8x128xf32> -> vector<8x128xf32>
    %129 = arith.addf %126, %128 : vector<8x128xf32>
    %130 = arith.negf %129 : vector<8x128xf32>
    %131 = math.exp %130 : vector<8x128xf32>
    %cst_37 = arith.constant 1.000000e+00 : f32
    %132 = vector.broadcast %cst_37 : f32 to vector<8x128xf32>
    %133 = arith.addf %132, %131 : vector<8x128xf32>
    %134 = arith.divf %132, %133 : vector<8x128xf32>
    %135 = vector.extract_strided_slice %134 {offsets = [0, 0], sizes = [8, 32], strides = [1, 1]} : vector<8x128xf32> to vector<8x32xf32>
    %136 = vector.extract_strided_slice %134 {offsets = [0, 32], sizes = [8, 32], strides = [1, 1]} : vector<8x128xf32> to vector<8x32xf32>
    %137 = vector.extract_strided_slice %134 {offsets = [0, 96], sizes = [8, 32], strides = [1, 1]} : vector<8x128xf32> to vector<8x32xf32>
    %138 = vector.extract_strided_slice %129 {offsets = [0, 64], sizes = [8, 32], strides = [1, 1]} : vector<8x128xf32> to vector<8x32xf32>
    %139 = math.tanh %138 : vector<8x32xf32>
    %140 = arith.mulf %136, %120 : vector<8x32xf32>
    %141 = arith.mulf %135, %139 : vector<8x32xf32>
    %142 = arith.addf %140, %141 : vector<8x32xf32>
    %143 = math.tanh %142 : vector<8x32xf32>
    %144 = arith.mulf %137, %143 : vector<8x32xf32>
    %c6_i32 = arith.constant 6 : i32
    %c8_i32_38 = arith.constant 8 : i32
    %145 = arith.muli %c6_i32, %c8_i32_38 : i32
    %146 = tpu.assume_multiple %145, 8 : i32
    %147 = arith.index_cast %146 : i32 to index
    %c0_39 = arith.constant 0 : index
    %148 = vector.load %arg10[%147, %c0_39] : memref<64x128xf32, #tpu.memory_space<vmem>>, vector<8x128xf32>
    %149 = arith.truncf %144 : vector<8x32xf32> to vector<8x32xbf16>
    %cst_40 = arith.constant dense<0.000000e+00> : vector<8x128xf32>
    %150 = tpu.matmul %149, %10, %cst_40 {dimension_numbers = #tpu.dot_dimension_numbers<[1], [0], [0], [1], [0, 0, 1, 1], [], []>} : vector<8x32xbf16>, vector<32x128xbf16>, vector<8x128xf32> -> vector<8x128xf32>
    %151 = arith.addf %148, %150 : vector<8x128xf32>
    %152 = arith.negf %151 : vector<8x128xf32>
    %153 = math.exp %152 : vector<8x128xf32>
    %cst_41 = arith.constant 1.000000e+00 : f32
    %154 = vector.broadcast %cst_41 : f32 to vector<8x128xf32>
    %155 = arith.addf %154, %153 : vector<8x128xf32>
    %156 = arith.divf %154, %155 : vector<8x128xf32>
    %157 = vector.extract_strided_slice %156 {offsets = [0, 0], sizes = [8, 32], strides = [1, 1]} : vector<8x128xf32> to vector<8x32xf32>
    %158 = vector.extract_strided_slice %156 {offsets = [0, 32], sizes = [8, 32], strides = [1, 1]} : vector<8x128xf32> to vector<8x32xf32>
    %159 = vector.extract_strided_slice %156 {offsets = [0, 96], sizes = [8, 32], strides = [1, 1]} : vector<8x128xf32> to vector<8x32xf32>
    %160 = vector.extract_strided_slice %151 {offsets = [0, 64], sizes = [8, 32], strides = [1, 1]} : vector<8x128xf32> to vector<8x32xf32>
    %161 = math.tanh %160 : vector<8x32xf32>
    %162 = arith.mulf %158, %142 : vector<8x32xf32>
    %163 = arith.mulf %157, %161 : vector<8x32xf32>
    %164 = arith.addf %162, %163 : vector<8x32xf32>
    %165 = math.tanh %164 : vector<8x32xf32>
    %166 = arith.mulf %159, %165 : vector<8x32xf32>
    %c7_i32 = arith.constant 7 : i32
    %c8_i32_42 = arith.constant 8 : i32
    %167 = arith.muli %c7_i32, %c8_i32_42 : i32
    %168 = tpu.assume_multiple %167, 8 : i32
    %169 = arith.index_cast %168 : i32 to index
    %c0_43 = arith.constant 0 : index
    %170 = vector.load %arg10[%169, %c0_43] : memref<64x128xf32, #tpu.memory_space<vmem>>, vector<8x128xf32>
    %171 = arith.truncf %166 : vector<8x32xf32> to vector<8x32xbf16>
    %cst_44 = arith.constant dense<0.000000e+00> : vector<8x128xf32>
    %172 = tpu.matmul %171, %10, %cst_44 {dimension_numbers = #tpu.dot_dimension_numbers<[1], [0], [0], [1], [0, 0, 1, 1], [], []>} : vector<8x32xbf16>, vector<32x128xbf16>, vector<8x128xf32> -> vector<8x128xf32>
    %173 = arith.addf %170, %172 : vector<8x128xf32>
    %174 = arith.negf %173 : vector<8x128xf32>
    %175 = math.exp %174 : vector<8x128xf32>
    %cst_45 = arith.constant 1.000000e+00 : f32
    %176 = vector.broadcast %cst_45 : f32 to vector<8x128xf32>
    %177 = arith.addf %176, %175 : vector<8x128xf32>
    %178 = arith.divf %176, %177 : vector<8x128xf32>
    %179 = vector.extract_strided_slice %178 {offsets = [0, 0], sizes = [8, 32], strides = [1, 1]} : vector<8x128xf32> to vector<8x32xf32>
    %180 = vector.extract_strided_slice %178 {offsets = [0, 32], sizes = [8, 32], strides = [1, 1]} : vector<8x128xf32> to vector<8x32xf32>
    %181 = vector.extract_strided_slice %178 {offsets = [0, 96], sizes = [8, 32], strides = [1, 1]} : vector<8x128xf32> to vector<8x32xf32>
    %182 = vector.extract_strided_slice %173 {offsets = [0, 64], sizes = [8, 32], strides = [1, 1]} : vector<8x128xf32> to vector<8x32xf32>
    %183 = math.tanh %182 : vector<8x32xf32>
    %184 = arith.mulf %180, %164 : vector<8x32xf32>
    %185 = arith.mulf %179, %183 : vector<8x32xf32>
    %186 = arith.addf %184, %185 : vector<8x32xf32>
    %187 = math.tanh %186 : vector<8x32xf32>
    %188 = arith.mulf %181, %187 : vector<8x32xf32>
    %c8_i32_46 = arith.constant 8 : i32
    %c0_47 = arith.constant 0 : index
    %c0_48 = arith.constant 0 : index
    %189 = vector.load %arg8[%c0_47, %c0_48] : memref<8x32xf32, #tpu.memory_space<vmem>>, vector<8x32xf32>
    tpu.vector_store %arg8[%c0_47, %c0_48], %188 {strides = array<i32>} : memref<8x32xf32, #tpu.memory_space<vmem>>, vector<8x32xf32>,
    %c0_49 = arith.constant 0 : index
    %c0_50 = arith.constant 0 : index
    %190 = vector.load %arg9[%c0_49, %c0_50] : memref<8x32xf32, #tpu.memory_space<vmem>>, vector<8x32xf32>
    tpu.vector_store %arg9[%c0_49, %c0_50], %186 {strides = array<i32>} : memref<8x32xf32, #tpu.memory_space<vmem>>, vector<8x32xf32>,
    %c0_i32_51 = arith.constant 0 : i32
    %191 = arith.cmpi eq, %arg0, %c0_i32_51 : i32
    %192 = arith.extui %191 : i1 to i32
    %c0_i32_52 = arith.constant 0 : i32
    %193 = arith.cmpi ne, %192, %c0_i32_52 : i32
    scf.if %193 {
      %c0_53 = arith.constant 0 : index
      %c0_54 = arith.constant 0 : index
      %194 = vector.load %arg5[%c0_53, %c0_54] : memref<1x32xf32, #tpu.memory_space<vmem>>, vector<1x32xf32>
      %195 = vector.broadcast %194 : vector<1x32xf32> to vector<8x32xf32>
      %196 = arith.mulf %188, %195 : vector<8x32xf32>
      %cst_55 = arith.constant dense<0.000000e+00> : vector<8xf32>
      %197 = vector.multi_reduction <add>, %196, %cst_55 [1] : vector<8x32xf32> to vector<8xf32>
      %198 = vector.shape_cast %197 : vector<8xf32> to vector<8x1xf32>
      %c0_56 = arith.constant 0 : index
      %c0_57 = arith.constant 0 : index
      %199 = vector.load %arg6[%c0_56, %c0_57] : memref<1x1xf32, #tpu.memory_space<vmem>>, vector<1x1xf32>
      %200 = vector.broadcast %199 : vector<1x1xf32> to vector<8x1xf32>
      %201 = arith.addf %198, %200 : vector<8x1xf32>
      %202 = arith.negf %201 : vector<8x1xf32>
      %203 = math.exp %202 : vector<8x1xf32>
      %cst_58 = arith.constant 1.000000e+00 : f32
      %204 = vector.broadcast %cst_58 : f32 to vector<8x1xf32>
      %205 = arith.addf %204, %203 : vector<8x1xf32>
      %206 = arith.divf %204, %205 : vector<8x1xf32>
      %c0_59 = arith.constant 0 : index
      %c0_60 = arith.constant 0 : index
      %207 = vector.load %arg7[%c0_59, %c0_60] : memref<8x1xf32, #tpu.memory_space<vmem>>, vector<8x1xf32>
      tpu.vector_store %arg7[%c0_59, %c0_60], %206 {strides = array<i32>} : memref<8x1xf32, #tpu.memory_space<vmem>>, vector<8x1xf32>,
    } else {
    }
    return
  }
  func.func @transform_0(%arg0: i32) -> (i32, i32) {
    %c0_i32 = arith.constant 0 : i32
    %c0_i32_0 = arith.constant 0 : i32
    return %arg0, %c0_i32 : i32, i32
  }
  func.func @transform_1(%arg0: i32) -> (i32, i32) {
    %c0_i32 = arith.constant 0 : i32
    %c0_i32_0 = arith.constant 0 : i32
    %c0_i32_1 = arith.constant 0 : i32
    return %c0_i32, %c0_i32_0 : i32, i32
  }
  func.func @transform_2(%arg0: i32) -> (i32, i32) {
    %c0_i32 = arith.constant 0 : i32
    %c0_i32_0 = arith.constant 0 : i32
    %c0_i32_1 = arith.constant 0 : i32
    return %c0_i32, %c0_i32_0 : i32, i32
  }
  func.func @transform_3(%arg0: i32) -> (i32, i32) {
    %c0_i32 = arith.constant 0 : i32
    %c0_i32_0 = arith.constant 0 : i32
    %c0_i32_1 = arith.constant 0 : i32
    return %c0_i32, %c0_i32_0 : i32, i32
  }
  func.func @transform_4(%arg0: i32) -> (i32, i32) {
    %c0_i32 = arith.constant 0 : i32
    %c0_i32_0 = arith.constant 0 : i32
    %c0_i32_1 = arith.constant 0 : i32
    return %c0_i32, %c0_i32_0 : i32, i32
  }
  func.func @transform_5(%arg0: i32) -> (i32, i32) {
    %c0_i32 = arith.constant 0 : i32
    %c0_i32_0 = arith.constant 0 : i32
    %c0_i32_1 = arith.constant 0 : i32
    return %c0_i32, %c0_i32_0 : i32, i32
  }
  func.func @transform_6(%arg0: i32) -> (i32, i32) {
    %c0_i32 = arith.constant 0 : i32
    %c0_i32_0 = arith.constant 0 : i32
    %c0_i32_1 = arith.constant 0 : i32
    return %c0_i32, %c0_i32_0 : i32, i32
  }
}

</mosaic_0001>

<llo_original>
// kernel: tpu_custom_call.1
$region0: #{tpu_custom_call.1}
  #allocation0 [shape = 'u32[]', space=smem, size = 0x4, offset = 0x4, fixed_abs, tag = 'smem constant byte address 0x4 - core index']
  #allocation1 [shape = 'u32[72,128]{1,0:T(1,128)}', space=vmem, size = 0x9000, scoped, tag = 'internal scratch']
  #allocation2 [shape = 'f32[8,32]{1,0:T(8,128)}', space=vmem, size = 0x1000, scoped, tag = 'scratch operand']
  #allocation3 [shape = 'f32[8,32]{1,0:T(8,128)}', space=vmem, size = 0x1000, scoped, tag = 'scratch operand']
  #allocation4 [shape = 'f32[64,128]{1,0:T(8,128)}', space=vmem, size = 0x8000, scoped, tag = 'scratch operand']
  #allocation5 [shape = 'f32[1,1]{1,0:T(1,128)S(1)}', space=vmem, size = 0x200, scoped, tag = 'scoped memory for tpu_custom_call.1']
  %s0 = inlined_call_operand.vmem [shape: bf16[64,16], index: 0, kind: input, shape index: {}]
  %s1 = inlined_call_operand.vmem [shape: bf16[16,128], index: 1, kind: input, shape index: {}]
  %s2 = inlined_call_operand.vmem [shape: bf16[32,128], index: 2, kind: input, shape index: {}]
  %s3 = inlined_call_operand.vmem [shape: f32[1,128], index: 3, kind: input, shape index: {}]
  %s4 = inlined_call_operand.vmem [shape: f32[1,32], index: 4, kind: input, shape index: {}]
  %s5 = inlined_call_operand.<no memory space> [shape: f32[1,1], index: 5, kind: input, shape index: {}]
  %s6 = inlined_call_operand.vmem [shape: f32[8,1], index: 6, kind: output, shape index: {}]
  %s7 = sld [smem:[#allocation0]]
  $region42: #{tpu_custom_call.1} parent=0
    _
  %s9 = ssub.s32 1, %s7
  %s10 = scalar_select 0, %s9, %s7
  %v11 = vstv %s5
  %12 = vst [vmem:[#allocation5] sm:$0x1] %v11
  // Predicated region
  $region2: #{tpu_custom_call.1} parent=0 // pred_check
    _
  $region3: #{tpu_custom_call.1} parent=0 // pred_check_branch
    %14 = sbr.rel (0) target = $region5
  $region4: #{tpu_custom_call.1} parent=0 // pred_region
    _
  $region5: #{tpu_custom_call.1} parent=0 // pred_fallthru
    _
  // Predicated region
  $region6: #{tpu_custom_call.1} parent=0 // pred_check
    _
  $region7: #{tpu_custom_call.1} parent=0 // pred_check_branch
    %16 = sbr.rel (0) target = $region9
  $region8: #{tpu_custom_call.1} parent=0 // pred_region
    _
  $region9: #{tpu_custom_call.1} parent=0 // pred_fallthru
    _
  // Predicated region
  $region10: #{tpu_custom_call.1} parent=0 // pred_check
    _
  $region11: #{tpu_custom_call.1} parent=0 // pred_check_branch
    %18 = sbr.rel (0) target = $region13
  $region12: #{tpu_custom_call.1} parent=0 // pred_region
    _
  $region13: #{tpu_custom_call.1} parent=0 // pred_fallthru
    _
  // Predicated region
  $region14: #{tpu_custom_call.1} parent=0 // pred_check
    _
  $region15: #{tpu_custom_call.1} parent=0 // pred_check_branch
    %20 = sbr.rel (0) target = $region17
  $region16: #{tpu_custom_call.1} parent=0 // pred_region
    _
  $region17: #{tpu_custom_call.1} parent=0 // pred_fallthru
    _
  // Predicated region
  $region18: #{tpu_custom_call.1} parent=0 // pred_check
    _
  $region19: #{tpu_custom_call.1} parent=0 // pred_check_branch
    %22 = sbr.rel (0) target = $region21
  $region20: #{tpu_custom_call.1} parent=0 // pred_region
    _
  $region21: #{tpu_custom_call.1} parent=0 // pred_fallthru
    _
  // Predicated region
  $region22: #{tpu_custom_call.1} parent=0 // pred_check
    _
  $region23: #{tpu_custom_call.1} parent=0 // pred_check_branch
    %24 = sbr.rel (0) target = $region25
  $region24: #{tpu_custom_call.1} parent=0 // pred_region
    _
  $region25: #{tpu_custom_call.1} parent=0 // pred_fallthru
    _
  %p26 = scmp.eq.s32.totalorder 0, 0
  // Predicated region
  $region26: #{tpu_custom_call.1} parent=0 // pred_check
    %p27 = pneg %p26
  $region27: #{tpu_custom_call.1} parent=0 // pred_check_branch
    %29 = sbr.rel (%p27) target = $region29
  $region28: #{tpu_custom_call.1} parent=0 // pred_region
    %vm30 = vcmask 261120
    %31 = vst.msk [vmem:[#allocation2] sm:$0xff] %vm30, 0.0
    %32 = vst.msk [vmem:[#allocation3] sm:$0xff] %vm30, 0.0
  $region29: #{tpu_custom_call.1} parent=0 // pred_fallthru
    _
  %v33 = vld [vmem:[%s0] sm:$0xf]
  %v34 = vld [vmem:[%s0 + $0x4] sm:$0xf]
  %v35 = vld [vmem:[%s0 + $0x8] sm:$0xf]
  %v36 = vld [vmem:[%s0 + $0xc] sm:$0xf]
  %v37 = vld [vmem:[%s0 + $0x10] sm:$0xf]
  %v38 = vld [vmem:[%s0 + $0x14] sm:$0xf]
  %v39 = vld [vmem:[%s0 + $0x18] sm:$0xf]
  %v40 = vld [vmem:[%s0 + $0x1c] sm:$0xf]
  %v41 = vld [vmem:[%s1] sm:$0xf]
  %v42 = vld [vmem:[%s1 + $0x4] sm:$0xf]
  %v43 = vld [vmem:[%s3] sm:$0x1]
  %v45 = vperm.slane %v43, 0
  %v55 = vunpack.c.l.b16 %v33
  %v56 = vunpack.c.l.b16 %v34
  %v57 = vunpack.c.l.b16 %v35
  %v58 = vunpack.c.l.b16 %v36
  %v59 = vunpack.c.l.b16 %v37
  %v60 = vunpack.c.l.b16 %v38
  %v61 = vunpack.c.l.b16 %v39
  %v62 = vunpack.c.l.b16 %v40
  %v63 = vpack.c.b16 %v56, %v55
  %v64 = vpack.c.b16 %v58, %v57
  %v65 = vpack.c.b16 %v60, %v59
  %v66 = vpack.c.b16 %v62, %v61
  %v69 = vunpack.c.l.b16 %v41
  %v70 = vunpack.c.l.b16 %v42
  %v71 = vpack.c.b16 %v70, %v69
  %vm73 = vcmask 130048
  %v75 = vsel %vm73, %v63, 0
  %v78 = vsel %vm73, %v64, 0
  %v81 = vsel %vm73, %v65, 0
  %v84 = vsel %vm73, %v66, 0
  %86 = vmatpush.bf16.msra.mxu0 0
  %87 = vmatpush.bf16.msra.mxu0 0
  %88 = vmatpush.bf16.msra.mxu0 0
  %89 = vmatpush.bf16.msra.mxu0 0
  %90 = vmatpush.bf16.msra.mxu0 0
  %91 = vmatpush.bf16.msra.mxu0 0
  %92 = vmatpush.bf16.msra.mxu0 0
  %93 = vmatpush.bf16.msra.mxu0 %v71
  %94 = vmatmul.bf16.gmra.mxu0 %v75
  %v95 = vpop.f32.mrf.mxu0
  %v96 = vadd.f32 %v45, %v95
  %v97 = vpop.f32.mrf.mxu0
  %v98 = vadd.f32 %v45, %v97
  %99 = vmatmul.bf16.gmra.mxu0 %v78
  %v100 = vpop.f32.mrf.mxu0
  %v101 = vadd.f32 %v45, %v100
  %v102 = vpop.f32.mrf.mxu0
  %v103 = vadd.f32 %v45, %v102
  %104 = vmatmul.bf16.gmra.mxu0 %v81
  %v105 = vpop.f32.mrf.mxu0
  %v106 = vadd.f32 %v45, %v105
  %v107 = vpop.f32.mrf.mxu0
  %v108 = vadd.f32 %v45, %v107
  %109 = vmatmul.bf16.gmra.mxu0 %v84
  %v110 = vpop.f32.mrf.mxu0
  %v111 = vadd.f32 %v45, %v110
  %v112 = vpop.f32.mrf.mxu0
  %v113 = vadd.f32 %v45, %v112
  %114 = vdwg.mxu0
  %115 = vst [vmem:[#allocation4] sm:$0xff] %v96
  %116 = vst [vmem:[#allocation4 + $0x8] sm:$0xff] %v98
  %117 = vst [vmem:[#allocation4 + $0x10] sm:$0xff] %v101
  %118 = vst [vmem:[#allocation4 + $0x18] sm:$0xff] %v103
  %119 = vst [vmem:[#allocation4 + $0x20] sm:$0xff] %v106
  %120 = vst [vmem:[#allocation4 + $0x28] sm:$0xff] %v108
  %121 = vst [vmem:[#allocation4 + $0x30] sm:$0xff] %v111
  %122 = vst [vmem:[#allocation4 + $0x38] sm:$0xff] %v113
  %v123 = vld [vmem:[%s2] sm:$0xf]
  %v124 = vld [vmem:[%s2 + $0x4] sm:$0xf]
  %v125 = vld [vmem:[%s2 + $0x8] sm:$0xf]
  %v126 = vld [vmem:[%s2 + $0xc] sm:$0xf]
  %v127 = vld [vmem:[#allocation2] sm:$0xff]
  %v128 = vld [vmem:[#allocation3] sm:$0xff]
  %v129 = vld [vmem:[#allocation4] sm:$0xff]
  %v130 = vpack.c.bf16 %v127, %v127
  %v135 = vunpack.c.l.b16 %v123
  %v136 = vunpack.c.l.b16 %v124
  %v137 = vunpack.c.l.b16 %v125
  %v138 = vunpack.c.l.b16 %v126
  %v139 = vpack.c.b16 %v136, %v135
  %v140 = vpack.c.b16 %v138, %v137
  %vm143 = vcmask 261120
  %v145 = vsel %vm143, %v130, 0
  %147 = vmatpush.bf16.msra.mxu0 0
  %148 = vmatpush.bf16.msra.mxu0 0
  %149 = vmatpush.bf16.msra.mxu0 0
  %150 = vmatpush.bf16.msra.mxu0 0
  %151 = vmatpush.bf16.msra.mxu0 0
  %152 = vmatpush.bf16.msra.mxu0 0
  %153 = vmatpush.bf16.msra.mxu0 %v140
  %154 = vmatpush.bf16.msra.mxu0 %v139
  %155 = vmatmul.bf16.gmra.mxu0 %v145
  %v156 = vpop.f32.mrf.mxu0
  %v157 = vadd.f32 0.0, %v156
  %v158 = vpop.f32.mrf.mxu0
  %159 = vdwg.mxu0
  %v160 = vadd.f32 %v129, %v157
  %v161 = vxor.u32 %v160, 2147483648
  %v162 = vmul.f32 %v161, 1.442695
  %v163 = vpow.pop %v162
  %v164 = vadd.f32 %v163, 1.0
  %v165 = vrcp.pop %v164
  %v166 = vmul.f32 %v164, %v165
  %v167 = vsub.f32 1.0, %v166
  %v168 = vmul.f32 %v165, %v167
  %v169 = vadd.f32 %v165, %v168
  %vm170 = vweird.f32 %v164
  %vm171 = vweird.f32 %v165
  %vm172 = vmor %vm170, %vm171
  %v173 = vsel %vm172, %v165, %v169
  %v174 = vand.u32 2147483647, %v164
  %vm175 = vcmp.eq.f32.partialorder %v174, 8.507059e+37
  %v176 = vand.u32 %v164, 2147483648
  %v177 = vor.u32 1.1754944e-38, %v176
  %v178 = vsel %vm175, %v177, %v173
  %v179 = vmul.f32 1.0, %v178
  %v180 = vtanh.pop %v160
  %182 = vrot.lane.b32.xlu0 %v128, 32
  %v183 = vpop.permute.xlu0 %182
  %v185 = vmul.f32 %v179, %v183
  %187 = vrot.lane.b32.xlu0 %v180, 64
  %v188 = vpop.permute.xlu0 %187
  %v190 = vmul.f32 %v179, %v188
  %192 = vrot.lane.b32.xlu0 %v190, 32
  %v193 = vpop.permute.xlu0 %192
  %v195 = vadd.f32 %v185, %v193
  %v196 = vtanh.pop %v195
  %198 = vrot.lane.b32.xlu0 %v196, 64
  %v199 = vpop.permute.xlu0 %198
  %v201 = vmul.f32 %v179, %v199
  %s202 = scalar_lea.vmem [#allocation4], 8
  %v203 = vld [vmem:[%s202] sm:$0xff]
  %v204 = vpack.c.bf16 %v201, %v201
  %206 = vrot.lane.b32.xlu0 %v204, 32
  %v207 = vpop.permute.xlu0 %206
  %v209 = vsel %vm143, %v207, 0
  %211 = vmatpush.bf16.msra.mxu0 0
  %212 = vmatpush.bf16.msra.mxu0 0
  %213 = vmatpush.bf16.msra.mxu0 0
  %214 = vmatpush.bf16.msra.mxu0 0
  %215 = vmatpush.bf16.msra.mxu0 0
  %216 = vmatpush.bf16.msra.mxu0 0
  %217 = vmatpush.bf16.msra.mxu0 %v140
  %218 = vmatpush.bf16.msra.mxu0 %v139
  %219 = vmatmul.bf16.gmra.mxu0 %v209
  %v220 = vpop.f32.mrf.mxu0
  %v221 = vadd.f32 0.0, %v220
  %v222 = vpop.f32.mrf.mxu0
  %223 = vdwg.mxu0
  %v224 = vadd.f32 %v203, %v221
  %v225 = vxor.u32 %v224, 2147483648
  %v226 = vmul.f32 %v225, 1.442695
  %v227 = vpow.pop %v226
  %v228 = vadd.f32 %v227, 1.0
  %v229 = vrcp.pop %v228
  %v230 = vmul.f32 %v228, %v229
  %v231 = vsub.f32 1.0, %v230
  %v232 = vmul.f32 %v229, %v231
  %v233 = vadd.f32 %v229, %v232
  %vm234 = vweird.f32 %v228
  %vm235 = vweird.f32 %v229
  %vm236 = vmor %vm234, %vm235
  %v237 = vsel %vm236, %v229, %v233
  %v238 = vand.u32 2147483647, %v228
  %vm239 = vcmp.eq.f32.partialorder %v238, 8.507059e+37
  %v240 = vand.u32 %v228, 2147483648
  %v241 = vor.u32 1.1754944e-38, %v240
  %v242 = vsel %vm239, %v241, %v237
  %v243 = vmul.f32 1.0, %v242
  %v244 = vtanh.pop %v224
  %v245 = vmul.f32 %v243, %v195
  %247 = vrot.lane.b32.xlu0 %v244, 64
  %v248 = vpop.permute.xlu0 %247
  %v250 = vmul.f32 %v243, %v248
  %252 = vrot.lane.b32.xlu0 %v250, 32
  %v253 = vpop.permute.xlu0 %252
  %v255 = vadd.f32 %v245, %v253
  %v256 = vtanh.pop %v255
  %258 = vrot.lane.b32.xlu0 %v256, 64
  %v259 = vpop.permute.xlu0 %258
  %v261 = vmul.f32 %v243, %v259
  %s262 = scalar_lea.vmem [#allocation4], 16
  %v263 = vld [vmem:[%s262] sm:$0xff]
  %v264 = vpack.c.bf16 %v261, %v261
  %266 = vrot.lane.b32.xlu0 %v264, 32
  %v267 = vpop.permute.xlu0 %266
  %v269 = vsel %vm143, %v267, 0
  %271 = vmatpush.bf16.msra.mxu0 0
  %272 = vmatpush.bf16.msra.mxu0 0
  %273 = vmatpush.bf16.msra.mxu0 0
  %274 = vmatpush.bf16.msra.mxu0 0
  %275 = vmatpush.bf16.msra.mxu0 0
  %276 = vmatpush.bf16.msra.mxu0 0
  %277 = vmatpush.bf16.msra.mxu0 %v140
  %278 = vmatpush.bf16.msra.mxu0 %v139
  %279 = vmatmul.bf16.gmra.mxu0 %v269
  %v280 = vpop.f32.mrf.mxu0
  %v281 = vadd.f32 0.0, %v280
  %v282 = vpop.f32.mrf.mxu0
  %283 = vdwg.mxu0
  %v284 = vadd.f32 %v263, %v281
  %v285 = vxor.u32 %v284, 2147483648
  %v286 = vmul.f32 %v285, 1.442695
  %v287 = vpow.pop %v286
  %v288 = vadd.f32 %v287, 1.0
  %v289 = vrcp.pop %v288
  %v290 = vmul.f32 %v288, %v289
  %v291 = vsub.f32 1.0, %v290
  %v292 = vmul.f32 %v289, %v291
  %v293 = vadd.f32 %v289, %v292
  %vm294 = vweird.f32 %v288
  %vm295 = vweird.f32 %v289
  %vm296 = vmor %vm294, %vm295
  %v297 = vsel %vm296, %v289, %v293
  %v298 = vand.u32 2147483647, %v288
  %vm299 = vcmp.eq.f32.partialorder %v298, 8.507059e+37
  %v300 = vand.u32 %v288, 2147483648
  %v301 = vor.u32 1.1754944e-38, %v300
  %v302 = vsel %vm299, %v301, %v297
  %v303 = vmul.f32 1.0, %v302
  %v304 = vtanh.pop %v284
  %v305 = vmul.f32 %v303, %v255
  %307 = vrot.lane.b32.xlu0 %v304, 64
  %v308 = vpop.permute.xlu0 %307
  %v310 = vmul.f32 %v303, %v308
  %312 = vrot.lane.b32.xlu0 %v310, 32
  %v313 = vpop.permute.xlu0 %312
  %v315 = vadd.f32 %v305, %v313
  %v316 = vtanh.pop %v315
  %318 = vrot.lane.b32.xlu0 %v316, 64
  %v319 = vpop.permute.xlu0 %318
  %v321 = vmul.f32 %v303, %v319
  %s322 = scalar_lea.vmem [#allocation4], 24
  %v323 = vld [vmem:[%s322] sm:$0xff]
  %v324 = vpack.c.bf16 %v321, %v321
  %326 = vrot.lane.b32.xlu0 %v324, 32
  %v327 = vpop.permute.xlu0 %326
  %v329 = vsel %vm143, %v327, 0
  %331 = vmatpush.bf16.msra.mxu0 0
  %332 = vmatpush.bf16.msra.mxu0 0
  %333 = vmatpush.bf16.msra.mxu0 0
  %334 = vmatpush.bf16.msra.mxu0 0
  %335 = vmatpush.bf16.msra.mxu0 0
  %336 = vmatpush.bf16.msra.mxu0 0
  %337 = vmatpush.bf16.msra.mxu0 %v140
  %338 = vmatpush.bf16.msra.mxu0 %v139
  %339 = vmatmul.bf16.gmra.mxu0 %v329
  %v340 = vpop.f32.mrf.mxu0
  %v341 = vadd.f32 0.0, %v340
  %v342 = vpop.f32.mrf.mxu0
  %343 = vdwg.mxu0
  %v344 = vadd.f32 %v323, %v341
  %v345 = vxor.u32 %v344, 2147483648
  %v346 = vmul.f32 %v345, 1.442695
  %v347 = vpow.pop %v346
  %v348 = vadd.f32 %v347, 1.0
  %v349 = vrcp.pop %v348
  %v350 = vmul.f32 %v348, %v349
  %v351 = vsub.f32 1.0, %v350
  %v352 = vmul.f32 %v349, %v351
  %v353 = vadd.f32 %v349, %v352
  %vm354 = vweird.f32 %v348
  %vm355 = vweird.f32 %v349
  %vm356 = vmor %vm354, %vm355
  %v357 = vsel %vm356, %v349, %v353
  %v358 = vand.u32 2147483647, %v348
  %vm359 = vcmp.eq.f32.partialorder %v358, 8.507059e+37
  %v360 = vand.u32 %v348, 2147483648
  %v361 = vor.u32 1.1754944e-38, %v360
  %v362 = vsel %vm359, %v361, %v357
  %v363 = vmul.f32 1.0, %v362
  %v364 = vtanh.pop %v344
  %v365 = vmul.f32 %v363, %v315
  %367 = vrot.lane.b32.xlu0 %v364, 64
  %v368 = vpop.permute.xlu0 %367
  %v370 = vmul.f32 %v363, %v368
  %372 = vrot.lane.b32.xlu0 %v370, 32
  %v373 = vpop.permute.xlu0 %372
  %v375 = vadd.f32 %v365, %v373
  %v376 = vtanh.pop %v375
  %378 = vrot.lane.b32.xlu0 %v376, 64
  %v379 = vpop.permute.xlu0 %378
  %v381 = vmul.f32 %v363, %v379
  %s382 = scalar_lea.vmem [#allocation4], 32
  %v383 = vld [vmem:[%s382] sm:$0xff]
  %v384 = vpack.c.bf16 %v381, %v381
  %386 = vrot.lane.b32.xlu0 %v384, 32
  %v387 = vpop.permute.xlu0 %386
  %v389 = vsel %vm143, %v387, 0
  %391 = vmatpush.bf16.msra.mxu0 0
  %392 = vmatpush.bf16.msra.mxu0 0
  %393 = vmatpush.bf16.msra.mxu0 0
  %394 = vmatpush.bf16.msra.mxu0 0
  %395 = vmatpush.bf16.msra.mxu0 0
  %396 = vmatpush.bf16.msra.mxu0 0
  %397 = vmatpush.bf16.msra.mxu0 %v140
  %398 = vmatpush.bf16.msra.mxu0 %v139
  %399 = vmatmul.bf16.gmra.mxu0 %v389
  %v400 = vpop.f32.mrf.mxu0
  %v401 = vadd.f32 0.0, %v400
  %v402 = vpop.f32.mrf.mxu0
  %403 = vdwg.mxu0
  %v404 = vadd.f32 %v383, %v401
  %v405 = vxor.u32 %v404, 2147483648
  %v406 = vmul.f32 %v405, 1.442695
  %v407 = vpow.pop %v406
  %v408 = vadd.f32 %v407, 1.0
  %v409 = vrcp.pop %v408
  %v410 = vmul.f32 %v408, %v409
  %v411 = vsub.f32 1.0, %v410
  %v412 = vmul.f32 %v409, %v411
  %v413 = vadd.f32 %v409, %v412
  %vm414 = vweird.f32 %v408
  %vm415 = vweird.f32 %v409
  %vm416 = vmor %vm414, %vm415
  %v417 = vsel %vm416, %v409, %v413
  %v418 = vand.u32 2147483647, %v408
  %vm419 = vcmp.eq.f32.partialorder %v418, 8.507059e+37
  %v420 = vand.u32 %v408, 2147483648
  %v421 = vor.u32 1.1754944e-38, %v420
  %v422 = vsel %vm419, %v421, %v417
  %v423 = vmul.f32 1.0, %v422
  %v424 = vtanh.pop %v404
  %v425 = vmul.f32 %v423, %v375
  %427 = vrot.lane.b32.xlu0 %v424, 64
  %v428 = vpop.permute.xlu0 %427
  %v430 = vmul.f32 %v423, %v428
  %432 = vrot.lane.b32.xlu0 %v430, 32
  %v433 = vpop.permute.xlu0 %432
  %v435 = vadd.f32 %v425, %v433
  %v436 = vtanh.pop %v435
  %438 = vrot.lane.b32.xlu0 %v436, 64
  %v439 = vpop.permute.xlu0 %438
  %v441 = vmul.f32 %v423, %v439
  %s442 = scalar_lea.vmem [#allocation4], 40
  %v443 = vld [vmem:[%s442] sm:$0xff]
  %v444 = vpack.c.bf16 %v441, %v441
  %446 = vrot.lane.b32.xlu0 %v444, 32
  %v447 = vpop.permute.xlu0 %446
  %v449 = vsel %vm143, %v447, 0
  %451 = vmatpush.bf16.msra.mxu0 0
  %452 = vmatpush.bf16.msra.mxu0 0
  %453 = vmatpush.bf16.msra.mxu0 0
  %454 = vmatpush.bf16.msra.mxu0 0
  %455 = vmatpush.bf16.msra.mxu0 0
  %456 = vmatpush.bf16.msra.mxu0 0
  %457 = vmatpush.bf16.msra.mxu0 %v140
  %458 = vmatpush.bf16.msra.mxu0 %v139
  %459 = vmatmul.bf16.gmra.mxu0 %v449
  %v460 = vpop.f32.mrf.mxu0
  %v461 = vadd.f32 0.0, %v460
  %v462 = vpop.f32.mrf.mxu0
  %463 = vdwg.mxu0
  %v464 = vadd.f32 %v443, %v461
  %v465 = vxor.u32 %v464, 2147483648
  %v466 = vmul.f32 %v465, 1.442695
  %v467 = vpow.pop %v466
  %v468 = vadd.f32 %v467, 1.0
  %v469 = vrcp.pop %v468
  %v470 = vmul.f32 %v468, %v469
  %v471 = vsub.f32 1.0, %v470
  %v472 = vmul.f32 %v469, %v471
  %v473 = vadd.f32 %v469, %v472
  %vm474 = vweird.f32 %v468
  %vm475 = vweird.f32 %v469
  %vm476 = vmor %vm474, %vm475
  %v477 = vsel %vm476, %v469, %v473
  %v478 = vand.u32 2147483647, %v468
  %vm479 = vcmp.eq.f32.partialorder %v478, 8.507059e+37
  %v480 = vand.u32 %v468, 2147483648
  %v481 = vor.u32 1.1754944e-38, %v480
  %v482 = vsel %vm479, %v481, %v477
  %v483 = vmul.f32 1.0, %v482
  %v484 = vtanh.pop %v464
  %v485 = vmul.f32 %v483, %v435
  %487 = vrot.lane.b32.xlu0 %v484, 64
  %v488 = vpop.permute.xlu0 %487
  %v490 = vmul.f32 %v483, %v488
  %492 = vrot.lane.b32.xlu0 %v490, 32
  %v493 = vpop.permute.xlu0 %492
  %v495 = vadd.f32 %v485, %v493
  %v496 = vtanh.pop %v495
  %498 = vrot.lane.b32.xlu0 %v496, 64
  %v499 = vpop.permute.xlu0 %498
  %v501 = vmul.f32 %v483, %v499
  %s502 = scalar_lea.vmem [#allocation4], 48
  %v503 = vld [vmem:[%s502] sm:$0xff]
  %v504 = vpack.c.bf16 %v501, %v501
  %506 = vrot.lane.b32.xlu0 %v504, 32
  %v507 = vpop.permute.xlu0 %506
  %v509 = vsel %vm143, %v507, 0
  %511 = vmatpush.bf16.msra.mxu0 0
  %512 = vmatpush.bf16.msra.mxu0 0
  %513 = vmatpush.bf16.msra.mxu0 0
  %514 = vmatpush.bf16.msra.mxu0 0
  %515 = vmatpush.bf16.msra.mxu0 0
  %516 = vmatpush.bf16.msra.mxu0 0
  %517 = vmatpush.bf16.msra.mxu0 %v140
  %518 = vmatpush.bf16.msra.mxu0 %v139
  %519 = vmatmul.bf16.gmra.mxu0 %v509
  %v520 = vpop.f32.mrf.mxu0
  %v521 = vadd.f32 0.0, %v520
  %v522 = vpop.f32.mrf.mxu0
  %523 = vdwg.mxu0
  %v524 = vadd.f32 %v503, %v521
  %v525 = vxor.u32 %v524, 2147483648
  %v526 = vmul.f32 %v525, 1.442695
  %v527 = vpow.pop %v526
  %v528 = vadd.f32 %v527, 1.0
  %v529 = vrcp.pop %v528
  %v530 = vmul.f32 %v528, %v529
  %v531 = vsub.f32 1.0, %v530
  %v532 = vmul.f32 %v529, %v531
  %v533 = vadd.f32 %v529, %v532
  %vm534 = vweird.f32 %v528
  %vm535 = vweird.f32 %v529
  %vm536 = vmor %vm534, %vm535
  %v537 = vsel %vm536, %v529, %v533
  %v538 = vand.u32 2147483647, %v528
  %vm539 = vcmp.eq.f32.partialorder %v538, 8.507059e+37
  %v540 = vand.u32 %v528, 2147483648
  %v541 = vor.u32 1.1754944e-38, %v540
  %v542 = vsel %vm539, %v541, %v537
  %v543 = vmul.f32 1.0, %v542
  %v544 = vtanh.pop %v524
  %v545 = vmul.f32 %v543, %v495
  %547 = vrot.lane.b32.xlu0 %v544, 64
  %v548 = vpop.permute.xlu0 %547
  %v550 = vmul.f32 %v543, %v548
  %552 = vrot.lane.b32.xlu0 %v550, 32
  %v553 = vpop.permute.xlu0 %552
  %v555 = vadd.f32 %v545, %v553
  %v556 = vtanh.pop %v555
  %558 = vrot.lane.b32.xlu0 %v556, 64
  %v559 = vpop.permute.xlu0 %558
  %v561 = vmul.f32 %v543, %v559
  %s562 = scalar_lea.vmem [#allocation4], 56
  %v563 = vld [vmem:[%s562] sm:$0xff]
  %v564 = vpack.c.bf16 %v561, %v561
  %566 = vrot.lane.b32.xlu0 %v564, 32
  %v567 = vpop.permute.xlu0 %566
  %v569 = vsel %vm143, %v567, 0
  %571 = vmatpush.bf16.msra.mxu0 0
  %572 = vmatpush.bf16.msra.mxu0 0
  %573 = vmatpush.bf16.msra.mxu0 0
  %574 = vmatpush.bf16.msra.mxu0 0
  %575 = vmatpush.bf16.msra.mxu0 0
  %576 = vmatpush.bf16.msra.mxu0 0
  %577 = vmatpush.bf16.msra.mxu0 %v140
  %578 = vmatpush.bf16.msra.mxu0 %v139
  %579 = vmatmul.bf16.gmra.mxu0 %v569
  %v580 = vpop.f32.mrf.mxu0
  %v581 = vadd.f32 0.0, %v580
  %v582 = vpop.f32.mrf.mxu0
  %583 = vdwg.mxu0
  %v584 = vadd.f32 %v563, %v581
  %v585 = vxor.u32 %v584, 2147483648
  %v586 = vmul.f32 %v585, 1.442695
  %v587 = vpow.pop %v586
  %v588 = vadd.f32 %v587, 1.0
  %v589 = vrcp.pop %v588
  %v590 = vmul.f32 %v588, %v589
  %v591 = vsub.f32 1.0, %v590
  %v592 = vmul.f32 %v589, %v591
  %v593 = vadd.f32 %v589, %v592
  %vm594 = vweird.f32 %v588
  %vm595 = vweird.f32 %v589
  %vm596 = vmor %vm594, %vm595
  %v597 = vsel %vm596, %v589, %v593
  %v598 = vand.u32 2147483647, %v588
  %vm599 = vcmp.eq.f32.partialorder %v598, 8.507059e+37
  %v600 = vand.u32 %v588, 2147483648
  %v601 = vor.u32 1.1754944e-38, %v600
  %v602 = vsel %vm599, %v601, %v597
  %v603 = vmul.f32 1.0, %v602
  %v604 = vtanh.pop %v584
  %v605 = vmul.f32 %v603, %v555
  %607 = vrot.lane.b32.xlu0 %v604, 64
  %v608 = vpop.permute.xlu0 %607
  %v610 = vmul.f32 %v603, %v608
  %612 = vrot.lane.b32.xlu0 %v610, 32
  %v613 = vpop.permute.xlu0 %612
  %v615 = vadd.f32 %v605, %v613
  %v616 = vtanh.pop %v615
  %618 = vrot.lane.b32.xlu0 %v616, 64
  %v619 = vpop.permute.xlu0 %618
  %v621 = vmul.f32 %v603, %v619
  %623 = vrot.lane.b32.xlu0 %v621, 32
  %v624 = vpop.permute.xlu0 %623
  %626 = vst.msk [vmem:[#allocation2] sm:$0xff] %vm143, %v624
  %628 = vrot.lane.b32.xlu0 %v615, 96
  %v629 = vpop.permute.xlu0 %628
  %631 = vst.msk [vmem:[#allocation3] sm:$0xff] %vm143, %v629
  // Predicated region
  $region30: #{tpu_custom_call.1} parent=0 // pred_check
    %p632 = pneg %p26
  $region31: #{tpu_custom_call.1} parent=0 // pred_check_branch
    %634 = sbr.rel (%p632) target = $region33
  $region32: #{tpu_custom_call.1} parent=0 // pred_region
    %v635 = vld [vmem:[%s4] sm:$0x1]
    %v637 = vperm.slane %v635, 0
    %638 = vrot.lane.b32.xlu0 %v637, 96
    %v639 = vpop.permute.xlu0 %638
    %v641 = vmul.f32 %v621, %v639
    %643 = vrot.lane.b32.xlu0 %v641, 32
    %v644 = vpop.permute.xlu0 %643
    %v646 = vsel %vm143, %v644, 0.0
    %647 = vadd.xlane.f32.xlu0 %v646
    %v648 = vpop.xlane.xlu0 %647
    %v649 = vld [vmem:[#allocation5] sm:$0x1]
    %v651 = vperm.slane %v649, 0
    %v653 = vadd.f32 %v648, %v651
    %v654 = vxor.u32 %v653, 2147483648
    %v655 = vmul.f32 %v654, 1.442695
    %v656 = vpow.pop %v655
    %v657 = vadd.f32 %v656, 1.0
    %v658 = vrcp.pop %v657
    %v659 = vmul.f32 %v657, %v658
    %v660 = vsub.f32 1.0, %v659
    %v661 = vmul.f32 %v658, %v660
    %v662 = vadd.f32 %v658, %v661
    %vm663 = vweird.f32 %v657
    %vm664 = vweird.f32 %v658
    %vm665 = vmor %vm663, %vm664
    %v666 = vsel %vm665, %v658, %v662
    %v667 = vand.u32 2147483647, %v657
    %vm668 = vcmp.eq.f32.partialorder %v667, 8.507059e+37
    %v669 = vand.u32 %v657, 2147483648
    %v670 = vor.u32 1.1754944e-38, %v669
    %v671 = vsel %vm668, %v670, %v666
    %v672 = vmul.f32 1.0, %v671
    %vm673 = vcmask 7168
    %674 = vst.msk [vmem:[%s6] sm:$0xff] %vm673, %v672
  $region33: #{tpu_custom_call.1} parent=0 // pred_fallthru
    _
  // Predicated region
  $region34: #{tpu_custom_call.1} parent=0 // pred_check
    _
  $region35: #{tpu_custom_call.1} parent=0 // pred_check_branch
    %676 = sbr.rel (0) target = $region37
  $region36: #{tpu_custom_call.1} parent=0 // pred_region
    _
  $region37: #{tpu_custom_call.1} parent=0 // pred_fallthru
    _
  // Predicated region
  $region38: #{tpu_custom_call.1} parent=0 // pred_check
    _
  $region39: #{tpu_custom_call.1} parent=0 // pred_check_branch
    %678 = sbr.rel (0) target = $region41
  $region40: #{tpu_custom_call.1} parent=0 // pred_region
    _
  $region41: #{tpu_custom_call.1} parent=0 // pred_fallthru
    _

</llo_original>
